<compile_context>
chip_gen: v7x
topology: tpu7x:2x2x1
jax: 0.10.0
libtpu: 0.0.40
codegen_flags: <defaults>
</compile_context>

<pallas_src>
import jax
import jax.numpy as jnp
from jax.experimental import pallas as pl
from jax.experimental.pallas import tpu as pltpu


def _denorm_kernel(x_ref, ms_ref, o_ref):
    # x_ref: (ROWS, COLS); ms_ref: (ROWS, 2) f32 with col 0 = mean, col 1 = std.
    x = x_ref[...].astype(jnp.float32)
    mean = ms_ref[:, 0:1]          # (ROWS, 1) -> broadcasts along the lane axis
    std = ms_ref[:, 1:2]
    o_ref[...] = (x * std + mean).astype(o_ref.dtype)


def _pick_tile(total, align, max_tile):
    """Block extent: full size if it fits (always legal on TPU), otherwise a
    multiple of `align` capped at max_tile (Pallas pads/clips edge blocks)."""
    max_tile = max(align, max_tile)
    if total <= max_tile or total < align:
        return total
    t = min(total, max_tile)
    t -= t % align
    return max(t, align)


def denormalize(x, mean, std, *, donate_x=False):
    """x: (N, C, H, W); mean, std: (C,). Returns x * std + mean per channel."""
    N, C, H, W = x.shape
    NC, HW = N * C, H * W
    itemsize = jnp.dtype(x.dtype).itemsize

    # Lane-dense 2-D view: row = n*C + c, cols = flattened spatial dims.
    x2 = x.reshape(NC, HW)

    # Fused per-row constants: (NC, 2) f32, [:,0]=mean, [:,1]=std.
    mean_c = jnp.asarray(mean, jnp.float32).reshape(C)
    std_c = jnp.asarray(std, jnp.float32).reshape(C)
    ms_rows = jnp.tile(jnp.stack([mean_c, std_c], axis=-1), (N, 1))

    # Dtype-aware sublane alignment: 8 rows for 4-byte dtypes, 16 for 2-byte,
    # 32 for 1-byte (packed dtypes pack rows along sublanes).
    row_align = 8 * max(1, 4 // itemsize)

    # ~4 MiB streaming blocks (>= 86% of HBM roofline on v6e, <10% grid-step
    # overhead on v7x). Worst case VMEM: 3x in + 2x out + 2x constants ~ 25 MiB,
    # under the explicit 48 MiB scoped-VMEM limit on every generation.
    target_bytes = 4 * 1024 * 1024
    tile_cols = _pick_tile(HW, 128, max(128, target_bytes // (8 * itemsize)))
    tile_rows = _pick_tile(
        NC, row_align,
        min(4096, max(row_align, target_bytes // (tile_cols * itemsize))))

    # If a large problem would collapse to a single grid step, split the row
    # axis so both v7x TensorCores can participate.
    if (pl.cdiv(NC, tile_rows) == 1 and pl.cdiv(HW, tile_cols) == 1
            and NC >= 2 * row_align and NC * HW * itemsize > (1 << 20)):
        half = pl.cdiv(NC, 2)
        half += (-half) % row_align
        tile_rows = min(tile_rows, half)

    grid = (pl.cdiv(NC, tile_rows), pl.cdiv(HW, tile_cols))

    # Deeper input buffering only when the pipeline is long enough to benefit;
    # fall back gracefully if this JAX version lacks pipeline_mode/Buffered.
    x_spec = pl.BlockSpec((tile_rows, tile_cols), lambda i, j: (i, j))
    if grid[0] * grid[1] >= 3:
        try:
            x_spec = pl.BlockSpec((tile_rows, tile_cols), lambda i, j: (i, j),
                                  pipeline_mode=pl.Buffered(3))
        except (AttributeError, TypeError):
            pass

    extra_kwargs = {}
    if donate_x:
        # In-place friendly: output aliases the (reshaped) input buffer.
        extra_kwargs["input_output_aliases"] = {0: 0}

    out2 = pl.pallas_call(
        _denorm_kernel,
        out_shape=jax.ShapeDtypeStruct((NC, HW), x.dtype),
        grid=grid,
        in_specs=[
            x_spec,
            pl.BlockSpec((tile_rows, 2), lambda i, j: (i, 0)),
        ],
        out_specs=pl.BlockSpec((tile_rows, tile_cols), lambda i, j: (i, j)),
        compiler_params=pltpu.CompilerParams(
            # Pure elementwise streaming: both axes independent -> "parallel"
            # (lets megacore/v7x shard the grid across TensorCores).
            dimension_semantics=("parallel", "parallel"),
            # Raise the scoped-VMEM ceiling (v5e default is 16 MiB) so the
            # larger double/triple-buffered blocks are legal everywhere.
            vmem_limit_bytes=48 * 1024 * 1024,
        ),
        **extra_kwargs,
    )(x2, ms_rows)

    return out2.reshape(N, C, H, W)


if __name__ == "__main__":
    key = jax.random.PRNGKey(0)
    N, C, H, W = 2, 4, 16, 16
    x = jax.random.normal(key, (N, C, H, W), dtype=jnp.float32)

    # Deterministic "ImageNet-like" per-channel stats for C=4 channels.
    mean = jnp.array([0.485, 0.456, 0.406, 0.5], dtype=jnp.float32)
    std = jnp.array([0.229, 0.224, 0.225, 0.25], dtype=jnp.float32)

    out = denormalize(x, mean, std)
    out = jax.block_until_ready(out)

    # Reference check (plain JAX, same semantics as the PyTorch module).
    ref = x * std[None, :, None, None] + mean[None, :, None, None]
    assert out.shape == (N, C, H, W)
    assert jnp.allclose(out, ref, atol=1e-6, rtol=1e-6)

    print("KERNEL_OK")
</pallas_src>

<mosaic_0001>
module attributes {stable_mosaic.version = 11 : i64} {
  func.func @_denorm_kernel(%arg0: i32, %arg1: i32, %arg2: memref<8x256xf32, #tpu.memory_space<vmem>>, %arg3: memref<8x2xf32, #tpu.memory_space<vmem>>, %arg4: memref<8x256xf32, #tpu.memory_space<vmem>>) attributes {dimension_semantics = [#tpu.dimension_semantics<parallel>, #tpu.dimension_semantics<parallel>], iteration_bounds = array<i64: 1, 1>, scalar_prefetch = 0 : i64, scratch_operands = 0 : i64, tpu.core_type = #tpu.core_type<tc>, window_params = [{transform_indices = @transform_0, window_bounds = array<i64: 8, 256>}, {transform_indices = @transform_1, window_bounds = array<i64: 8, 2>}, {transform_indices = @transform_2, window_bounds = array<i64: 8, 256>}]} {
    %c0 = arith.constant 0 : index
    %c0_0 = arith.constant 0 : index
    %0 = vector.load %arg2[%c0, %c0_0] : memref<8x256xf32, #tpu.memory_space<vmem>>, vector<8x256xf32>
    %c0_1 = arith.constant 0 : index
    %c0_2 = arith.constant 0 : index
    %1 = vector.load %arg3[%c0_1, %c0_2] : memref<8x2xf32, #tpu.memory_space<vmem>>, vector<8x1xf32>
    %c0_3 = arith.constant 0 : index
    %c1 = arith.constant 1 : index
    %2 = vector.load %arg3[%c0_3, %c1] : memref<8x2xf32, #tpu.memory_space<vmem>>, vector<8x1xf32>
    %3 = vector.broadcast %2 : vector<8x1xf32> to vector<8x256xf32>
    %4 = arith.mulf %0, %3 : vector<8x256xf32>
    %5 = vector.broadcast %1 : vector<8x1xf32> to vector<8x256xf32>
    %6 = arith.addf %4, %5 : vector<8x256xf32>
    %c0_4 = arith.constant 0 : index
    %c0_5 = arith.constant 0 : index
    %7 = vector.load %arg4[%c0_4, %c0_5] : memref<8x256xf32, #tpu.memory_space<vmem>>, vector<8x256xf32>
    tpu.vector_store %arg4[%c0_4, %c0_5], %6 {strides = array<i32>} : memref<8x256xf32, #tpu.memory_space<vmem>>, vector<8x256xf32>,
    return
  }
  func.func @transform_0(%arg0: i32, %arg1: i32) -> (i32, i32) {
    %c0_i32 = arith.constant 0 : i32
    return %arg0, %arg1 : i32, i32
  }
  func.func @transform_1(%arg0: i32, %arg1: i32) -> (i32, i32) {
    %c0_i32 = arith.constant 0 : i32
    %c0_i32_0 = arith.constant 0 : i32
    return %arg0, %c0_i32 : i32, i32
  }
  func.func @transform_2(%arg0: i32, %arg1: i32) -> (i32, i32) {
    %c0_i32 = arith.constant 0 : i32
    return %arg0, %arg1 : i32, i32
  }
}

</mosaic_0001>

<llo_original>
// kernel: tpu_custom_call.1
$region0: #{tpu_custom_call.1}
  #allocation0 [shape = 'u32[]', space=smem, size = 0x4, offset = 0x4, fixed_abs, tag = 'smem constant byte address 0x4 - core index']
  #allocation1 [shape = 'u32[144,128]{1,0:T(1,128)}', space=vmem, size = 0x12000, scoped, tag = 'internal scratch']
  %s0 = inlined_call_operand.hbm [shape: f32[8,256], index: 0, kind: input, shape index: {}]
  %s1 = inlined_call_operand.vmem [shape: f32[8,2], index: 1, kind: input, shape index: {}]
  %s2 = inlined_call_operand.hbm [shape: f32[8,256], index: 2, kind: output, shape index: {}]
  %s3 = sld [smem:[#allocation0]]
  $region22: #{tpu_custom_call.1} parent=0
    _
  %s5 = ssub.s32 1, %s3
  %s6 = scalar_select 0, %s5, %s3
  $region1: #{tpu_custom_call.1} parent=0
    #allocation2 [shape = 'u8[8192]{0}', space=vmem, size = 0x2000, scoped, tag = 'input window, operand 0, single buffered']
    #allocation3 [shape = 's32[1]{0}', space=sflag, size = 0x4, scoped, tag = 'scoped memory for tpu_custom_call.1']
    #allocation4 [shape = 's32[1]{0}', space=sflag, size = 0x4, scoped, tag = 'scoped memory for tpu_custom_call.1']
    #allocation5 [shape = 'u8[8192]{0}', space=vmem, size = 0x2000, scoped, tag = 'output window, operand 0, single buffered']
    %7 = vsyncpa [#allocation3], 0
    %8 = vsyncpa [#allocation4], 0
    // Predicated region
    $region2: #{tpu_custom_call.1} parent=1 // pred_check
      _
    $region3: #{tpu_custom_call.1} parent=1 // pred_check_branch
      %10 = sbr.rel (0) target = $region5
    $region4: #{tpu_custom_call.1} parent=1 // pred_region
      %s12 = ssub.s32 256, 256
      %13 = vsyncadd [#allocation3], %s12
      %s15 = sshll.u32 [#allocation2], 4
      %s16 = int_to_ptr.vmem [resolvable:$true] %s15
      %18 = dma.hbm_to_vmem [thread:$0]  %s0, 256, %s16, [#allocation3]
    $region5: #{tpu_custom_call.1} parent=1 // pred_fallthru
      _
    // Predicated region
    $region6: #{tpu_custom_call.1} parent=1 // pred_check
      _
    $region7: #{tpu_custom_call.1} parent=1 // pred_check_branch
      %20 = sbr.rel (0) target = $region9
    $region8: #{tpu_custom_call.1} parent=1 // pred_region
      _
    $region9: #{tpu_custom_call.1} parent=1 // pred_fallthru
      _
    // Predicated region
    $region10: #{tpu_custom_call.1} parent=1 // pred_check
      _
    $region11: #{tpu_custom_call.1} parent=1 // pred_check_branch
      %22 = sbr.rel (0) target = $region13
    $region12: #{tpu_custom_call.1} parent=1 // pred_region
      %23 = dma.done [#allocation3], 256
    $region13: #{tpu_custom_call.1} parent=1 // pred_fallthru
      _
    %v24 = vld [vmem:[#allocation2] sm:$0xff]
    %v25 = vld [vmem:[#allocation2 + $0x8] sm:$0xff]
    %v26 = vld [vmem:[%s1] sm:$0xff]
    %28 = vset.pattern.permute.xlu0 1
    %29 = vperm.xlu0 %28, %v26
    %v30 = vpop.permute.xlu0 %29
    %v32 = vmul.f32 %v24, %v30
    %v33 = vmul.f32 %v25, %v30
    %34 = vset.pattern.permute.xlu0 0
    %35 = vperm.xlu0 %34, %v26
    %v36 = vpop.permute.xlu0 %35
    %v38 = vadd.f32 %v32, %v36
    %v39 = vadd.f32 %v33, %v36
    %40 = vst [vmem:[#allocation5] sm:$0xff] %v38
    %41 = vst [vmem:[#allocation5 + $0x8] sm:$0xff] %v39
    // Predicated region
    $region14: #{tpu_custom_call.1} parent=1 // pred_check
      _
    $region15: #{tpu_custom_call.1} parent=1 // pred_check_branch
      %43 = sbr.rel (0) target = $region17
    $region16: #{tpu_custom_call.1} parent=1 // pred_region
      %s45 = ssub.s32 256, 256
      %46 = vsyncadd [#allocation4], %s45
      %s48 = sshll.u32 [#allocation5], 4
      %s49 = int_to_ptr.vmem [resolvable:$true] %s48
      %51 = dma.vmem_to_hbm [thread:$0]  %s49, 256, %s2, [#allocation4]
    $region17: #{tpu_custom_call.1} parent=1 // pred_fallthru
      _
    // Predicated region
    $region18: #{tpu_custom_call.1} parent=1 // pred_check
      _
    $region19: #{tpu_custom_call.1} parent=1 // pred_check_branch
      %53 = sbr.rel (0) target = $region21
    $region20: #{tpu_custom_call.1} parent=1 // pred_region
      %54 = dma.done [#allocation4], 256
    $region21: #{tpu_custom_call.1} parent=1 // pred_fallthru
      _
    %55 = vsyncpa [#allocation3], 1
    %56 = vsyncpa [#allocation4], 1

</llo_original>
